<compile_context>
chip_gen: v7x
topology: tpu7x:2x2x1
jax: 0.10.0
libtpu: 0.0.40
codegen_flags: <defaults>
</compile_context>

<pallas_src>
import functools

import jax
import jax.numpy as jnp
from jax.experimental import pallas as pl
from jax.experimental.pallas import tpu as pltpu


def _round_up(x, m):
    return (x + m - 1) // m * m


def _budget_and_limit():
    """Per-generation DMA block budget and scoped-VMEM limit.

    Pure HBM-read bound kernel: large blocks amortize the ~0.35 us/step grid
    overhead.  v7x (64 MiB VMEM/TC) -> ~8 MiB blocks; v5e/v6e (128 MiB) ->
    ~16 MiB blocks.  The scoped VMEM limit is raised so the 2x double-buffered
    input plus scratch comfortably fits.
    """
    try:
        info = pltpu.get_tpu_info()
        vmem_bytes = int(getattr(info, "vmem_capacity_bytes", 64 << 20))
    except Exception:
        vmem_bytes = 64 << 20
    budget = max(4 << 20, min(16 << 20, vmem_bytes // 8))
    limit = min(vmem_bytes - (8 << 20), 2 * budget + (16 << 20))
    return budget, int(limit)


def _choose_tiles(rows, hw, itemsize, budget):
    """Pick (row_tile, hw_tile).

    Constraints: (8,128)-aligned, one input block ~= `budget` bytes, >= 2 row
    blocks whenever possible (so the "parallel" axis engages both v7x
    TensorCores), and an hw tile that divides hw when that is cheap (so only
    the final lane-block ever needs masking).
    """
    sub = max(8, 32 // itemsize)               # sublane multiple: f32->8, bf16->16
    rows_padded = _round_up(rows, sub)
    row_cap = rows_padded
    if rows_padded >= 2 * sub:
        row_cap = _round_up((rows_padded + 1) // 2, sub)   # >= 2 row blocks

    row_bytes = hw * itemsize
    if row_bytes * sub <= budget:
        # Full-hw blocks; grow the row tile up to the budget (capped for megacore).
        tr = (budget // row_bytes) // sub * sub
        tr = max(sub, min(tr, row_cap))
        return tr, hw

    # hw too wide even for a minimal-row block -> tile the reduction axis too.
    # Keep a moderately tall row tile (avoids sliver accumulators / tiny epilogues).
    tr = min(row_cap, max(sub, _round_up(64, sub)))
    thw = (budget // (tr * itemsize)) // 128 * 128
    thw = max(128, min(thw, _round_up(hw, 128)))
    # Prefer a lane tile that divides hw exactly (drops tail masking entirely)
    # as long as it costs at most 2x the budget-optimal step count.
    cand = thw
    while cand >= 128 and 2 * cand >= thw:
        if hw % cand == 0:
            return tr, cand
        cand -= 128
    return tr, thw


def _block_partial(x_ref, powfn, *, eps, thw, masked, k, hw):
    """Fold one (tr, thw) input block into a lane-dense (tr, 128) partial sum.

    Reads the block slab-by-slab (128 lanes at a time) from VMEM, applies
    clamp+pow per slab (no block-sized f32 intermediates), and combines slabs
    with a pairwise tree of VALU adds (short dependency chain, no XLU).
    """
    tr = x_ref.shape[0]
    n_full = thw // 128
    rem = thw - n_full * 128

    slabs = []
    for s in range(n_full):
        xs = x_ref[:, s * 128:(s + 1) * 128].astype(jnp.float32)
        xs = powfn(jnp.maximum(xs, eps))
        if masked:
            lane = jax.lax.broadcasted_iota(jnp.int32, xs.shape, 1)
            xs = jnp.where(k * thw + s * 128 + lane < hw, xs, 0.0)
        slabs.append(xs)

    if rem:
        # Only possible when thw == hw (single lane-block) -> never masked.
        xt = x_ref[:, n_full * 128:].astype(jnp.float32)
        xt = powfn(jnp.maximum(xt, eps))
        tail = jnp.sum(xt, axis=-1, keepdims=True)                  # (tr, 1)
        lane = jax.lax.broadcasted_iota(jnp.int32, (tr, 128), 1)
        slabs.append(jnp.where(lane == 0, tail, 0.0))

    # Pairwise tree fold: pure VPU adds, log-depth dependency chain.
    while len(slabs) > 1:
        nxt = [a + b for a, b in zip(slabs[::2], slabs[1::2])]
        if len(slabs) % 2:
            nxt.append(slabs[-1])
        slabs = nxt
    return slabs[0]


def _gem_body(x_ref, o_ref, acc_ref, powfn, finalize, *, inv_hw, eps, hw, thw):
    k = pl.program_id(1)
    n_k = pl.num_programs(1)

    @pl.when(k == 0)
    def _():
        acc_ref[...] = jnp.zeros_like(acc_ref)

    def accumulate(masked):
        part = _block_partial(x_ref, powfn, eps=eps, thw=thw,
                              masked=masked, k=k, hw=hw)
        # Fold 1/hw into every partial so the f32 accumulator tracks a running
        # mean (keeps magnitudes bounded for large spatial maps / large p).
        acc_ref[...] += part * inv_hw

    if hw % thw != 0:
        # Only the final lane-block reads past hw -> pay the mask only there.
        @pl.when(k < n_k - 1)
        def _():
            accumulate(masked=False)

        @pl.when(k == n_k - 1)
        def _():
            accumulate(masked=True)
    else:
        accumulate(masked=False)

    @pl.when(k == n_k - 1)
    def _():
        # Single cross-lane (XLU) reduce per row tile, then the per-row 1/p pow.
        mean = jnp.sum(acc_ref[...], axis=-1, keepdims=True)        # (tr, 1)
        o_ref[...] = finalize(mean).astype(o_ref.dtype)


def _gem_kernel_static(x_ref, o_ref, acc_ref, *, p_int, inv_hw, eps, hw, thw):
    """p baked in as a small integer -> elementwise pow is repeated VALU multiplies."""
    def powfn(v):
        r = v
        for _ in range(p_int - 1):
            r = r * v
        return r

    def finalize(mean):
        return mean if p_int == 1 else mean ** (1.0 / p_int)

    _gem_body(x_ref, o_ref, acc_ref, powfn, finalize,
              inv_hw=inv_hw, eps=eps, hw=hw, thw=thw)


def _gem_kernel_runtime(p_ref, x_ref, o_ref, acc_ref, *, inv_hw, eps, hw, thw):
    """p is a runtime (learnable) scalar, delivered via scalar prefetch (SMEM)."""
    p = p_ref[0]
    # TODO(synk): fractional runtime p lowers to exp(p*log(x)) on the single EUP
    # slot and can flip the kernel EUP-bound on v7x; integer-valued learnable p
    # could be dispatched to repeated VALU multiplies if that becomes binding.
    powfn = lambda v: v ** p
    finalize = lambda mean: mean ** (1.0 / p)
    _gem_body(x_ref, o_ref, acc_ref, powfn, finalize,
              inv_hw=inv_hw, eps=eps, hw=hw, thw=thw)


def gem_pallas(x, p=3, eps=1e-6):
    """x: (B, C, H, W). p: Python int/float (specialized) or (1,) array (runtime).

    Returns (B, C, 1, 1), matching GeM.forward.
    """
    B, C, H, W = x.shape
    rows, hw = B * C, H * W
    xf = x.reshape(rows, hw)

    itemsize = jnp.dtype(x.dtype).itemsize
    budget, vmem_limit = _budget_and_limit()
    tr, thw = _choose_tiles(rows, hw, itemsize, budget)
    n_i = pl.cdiv(rows, tr)
    n_k = pl.cdiv(hw, thw)

    x_spec = pl.BlockSpec((tr, thw), lambda i, k, *refs: (i, k))
    # Output block index constant across k -> accumulator/epilogue pattern.
    # TODO(synk): output last-dim of 1 still uses masked stores; output bytes are
    # tiny relative to the input read, so the lane-dense (1, TR) variant is skipped.
    o_spec = pl.BlockSpec((tr, 1), lambda i, k, *refs: (i, 0))
    scratch = [pltpu.VMEM((tr, 128), jnp.float32)]     # lane-dense running-mean acc
    cparams = pltpu.CompilerParams(
        dimension_semantics=("parallel", "arbitrary"),  # rows shard across TCs on v7x
        vmem_limit_bytes=vmem_limit,
    )
    out_shape = jax.ShapeDtypeStruct((rows, 1), x.dtype)
    bytes_accessed = rows * hw * itemsize + rows * itemsize

    p_static = None
    if isinstance(p, (int, float)) and float(p) == round(float(p)) and 1 <= round(float(p)) <= 8:
        p_static = int(round(float(p)))

    if p_static is not None:
        kern = functools.partial(
            _gem_kernel_static,
            p_int=p_static, inv_hw=1.0 / hw, eps=float(eps), hw=hw, thw=thw)
        cost = pl.CostEstimate(
            flops=(p_static + 2) * rows * hw,
            transcendentals=rows,
            bytes_accessed=bytes_accessed)
        out = pl.pallas_call(
            kern,
            out_shape=out_shape,
            grid_spec=pltpu.PrefetchScalarGridSpec(
                num_scalar_prefetch=0,
                grid=(n_i, n_k),
                in_specs=[x_spec],
                out_specs=o_spec,
                scratch_shapes=scratch),
            compiler_params=cparams,
            cost_estimate=cost,
        )(xf)
    else:
        p_arr = jnp.asarray(p, dtype=jnp.float32).reshape(1)
        kern = functools.partial(
            _gem_kernel_runtime,
            inv_hw=1.0 / hw, eps=float(eps), hw=hw, thw=thw)
        cost = pl.CostEstimate(
            flops=4 * rows * hw,
            transcendentals=2 * rows * hw + 2 * rows,
            bytes_accessed=bytes_accessed)
        out = pl.pallas_call(
            kern,
            out_shape=out_shape,
            grid_spec=pltpu.PrefetchScalarGridSpec(
                num_scalar_prefetch=1,          # p (learnable scalar) -> SMEM
                grid=(n_i, n_k),
                in_specs=[x_spec],
                out_specs=o_spec,
                scratch_shapes=scratch),
            compiler_params=cparams,
            cost_estimate=cost,
        )(p_arr, xf)

    return out.reshape(B, C, 1, 1)


if __name__ == "__main__":
    key = jax.random.PRNGKey(0)
    B, C, H, W = 2, 4, 16, 16
    x = jax.random.normal(key, (B, C, H, W), dtype=jnp.float32)
    eps = 1e-6

    # Static path: p specialized to the module's default init (torch.ones(1) * 3).
    y_static = gem_pallas(x, p=3, eps=eps)

    # Runtime path: p kept as a learnable float parameter.
    p_param = jnp.ones((1,), dtype=jnp.float32) * 3.0
    y_runtime = gem_pallas(x, p=p_param, eps=eps)

    jax.block_until_ready((y_static, y_runtime))

    # Pure-JAX reference.
    ref = jnp.mean(jnp.maximum(x, eps) ** 3.0, axis=(-2, -1), keepdims=True) ** (1.0 / 3.0)
    assert y_static.shape == (B, C, 1, 1)
    assert y_runtime.shape == (B, C, 1, 1)
    assert jnp.allclose(y_static, ref, atol=1e-5, rtol=1e-5)
    assert jnp.allclose(y_runtime, ref, atol=1e-5, rtol=1e-5)

    print("KERNEL_OK")
</pallas_src>

<mosaic_0001>
module attributes {stable_mosaic.version = 11 : i64} {
  func.func @_gem_kernel_static(%arg0: i32, %arg1: i32, %arg2: memref<8x256xf32, #tpu.memory_space<vmem>>, %arg3: memref<8x1xf32, #tpu.memory_space<vmem>>, %arg4: memref<8x128xf32, #tpu.memory_space<vmem>>) attributes {dimension_semantics = [#tpu.dimension_semantics<parallel>, #tpu.dimension_semantics<arbitrary>], iteration_bounds = array<i64: 1, 1>, scalar_prefetch = 0 : i64, scratch_operands = 1 : i64, tpu.core_type = #tpu.core_type<tc>, window_params = [{transform_indices = @transform_0, window_bounds = array<i64: 8, 256>}, {transform_indices = @transform_1, window_bounds = array<i64: 8, 1>}]} {
    %c0_i32 = arith.constant 0 : i32
    %0 = arith.cmpi eq, %arg1, %c0_i32 : i32
    %1 = arith.extui %0 : i1 to i32
    %c0_i32_0 = arith.constant 0 : i32
    %2 = arith.cmpi ne, %1, %c0_i32_0 : i32
    scf.if %2 {
      %cst_11 = arith.constant 0.000000e+00 : f32
      %22 = vector.broadcast %cst_11 : f32 to vector<8x128xf32>
      %c0_12 = arith.constant 0 : index
      %c0_13 = arith.constant 0 : index
      %23 = vector.load %arg4[%c0_12, %c0_13] : memref<8x128xf32, #tpu.memory_space<vmem>>, vector<8x128xf32>
      tpu.vector_store %arg4[%c0_12, %c0_13], %22 {strides = array<i32>} : memref<8x128xf32, #tpu.memory_space<vmem>>, vector<8x128xf32>,
    } else {
    }
    %c0 = arith.constant 0 : index
    %c0_1 = arith.constant 0 : index
    %3 = vector.load %arg2[%c0, %c0_1] : memref<8x256xf32, #tpu.memory_space<vmem>>, vector<8x128xf32>
    %cst = arith.constant 9.99999997E-7 : f32
    %4 = vector.broadcast %cst : f32 to vector<8x128xf32>
    %5 = arith.maximumf %3, %4 : vector<8x128xf32>
    %6 = arith.mulf %5, %5 : vector<8x128xf32>
    %7 = arith.mulf %6, %5 : vector<8x128xf32>
    %c0_2 = arith.constant 0 : index
    %c128 = arith.constant 128 : index
    %8 = vector.load %arg2[%c0_2, %c128] : memref<8x256xf32, #tpu.memory_space<vmem>>, vector<8x128xf32>
    %cst_3 = arith.constant 9.99999997E-7 : f32
    %9 = vector.broadcast %cst_3 : f32 to vector<8x128xf32>
    %10 = arith.maximumf %8, %9 : vector<8x128xf32>
    %11 = arith.mulf %10, %10 : vector<8x128xf32>
    %12 = arith.mulf %11, %10 : vector<8x128xf32>
    %13 = arith.addf %7, %12 : vector<8x128xf32>
    %c0_4 = arith.constant 0 : index
    %c0_5 = arith.constant 0 : index
    %14 = vector.load %arg4[%c0_4, %c0_5] : memref<8x128xf32, #tpu.memory_space<vmem>>, vector<8x128xf32>
    %cst_6 = arith.constant 3.906250e-03 : f32
    %15 = vector.broadcast %cst_6 : f32 to vector<8x128xf32>
    %16 = arith.mulf %13, %15 : vector<8x128xf32>
    %17 = arith.addf %14, %16 : vector<8x128xf32>
    %c0_7 = arith.constant 0 : index
    %c0_8 = arith.constant 0 : index
    %18 = vector.load %arg4[%c0_7, %c0_8] : memref<8x128xf32, #tpu.memory_space<vmem>>, vector<8x128xf32>
    tpu.vector_store %arg4[%c0_7, %c0_8], %17 {strides = array<i32>} : memref<8x128xf32, #tpu.memory_space<vmem>>, vector<8x128xf32>,
    %c0_i32_9 = arith.constant 0 : i32
    %19 = arith.cmpi eq, %arg1, %c0_i32_9 : i32
    %20 = arith.extui %19 : i1 to i32
    %c0_i32_10 = arith.constant 0 : i32
    %21 = arith.cmpi ne, %20, %c0_i32_10 : i32
    scf.if %21 {
      %c0_11 = arith.constant 0 : index
      %c0_12 = arith.constant 0 : index
      %22 = vector.load %arg4[%c0_11, %c0_12] : memref<8x128xf32, #tpu.memory_space<vmem>>, vector<8x128xf32>
      %cst_13 = arith.constant dense<0.000000e+00> : vector<8xf32>
      %23 = vector.multi_reduction <add>, %22, %cst_13 [1] : vector<8x128xf32> to vector<8xf32>
      %24 = vector.shape_cast %23 : vector<8xf32> to vector<8x1xf32>
      %cst_14 = arith.constant 0.333333343 : f32
      %25 = vector.broadcast %cst_14 : f32 to vector<8x1xf32>
      %26 = math.powf %24, %25 : vector<8x1xf32>
      %c0_15 = arith.constant 0 : index
      %c0_16 = arith.constant 0 : index
      %27 = vector.load %arg3[%c0_15, %c0_16] : memref<8x1xf32, #tpu.memory_space<vmem>>, vector<8x1xf32>
      tpu.vector_store %arg3[%c0_15, %c0_16], %26 {strides = array<i32>} : memref<8x1xf32, #tpu.memory_space<vmem>>, vector<8x1xf32>,
    } else {
    }
    return
  }
  func.func @transform_0(%arg0: i32, %arg1: i32) -> (i32, i32) {
    %c0_i32 = arith.constant 0 : i32
    return %arg0, %arg1 : i32, i32
  }
  func.func @transform_1(%arg0: i32, %arg1: i32) -> (i32, i32) {
    %c0_i32 = arith.constant 0 : i32
    %c0_i32_0 = arith.constant 0 : i32
    return %arg0, %c0_i32 : i32, i32
  }
}

</mosaic_0001>

<llo_original>
// kernel: tpu_custom_call.1
$region0: #{tpu_custom_call.1}
  #allocation0 [shape = 'u32[]', space=smem, size = 0x4, offset = 0x4, fixed_abs, tag = 'smem constant byte address 0x4 - core index']
  #allocation1 [shape = 'u32[144,128]{1,0:T(1,128)}', space=vmem, size = 0x12000, scoped, tag = 'internal scratch']
  #allocation2 [shape = 'f32[8,128]{1,0:T(8,128)}', space=vmem, size = 0x1000, scoped, tag = 'scratch operand']
  %s0 = inlined_call_operand.hbm [shape: f32[8,256], index: 0, kind: input, shape index: {}]
  %s1 = inlined_call_operand.vmem [shape: f32[8,1], index: 1, kind: output, shape index: {}]
  %s2 = sld [smem:[#allocation0]]
  $region26: #{tpu_custom_call.1} parent=0
    _
  %s4 = ssub.s32 1, %s2
  %s5 = scalar_select 0, %s4, %s2
  $region1: #{tpu_custom_call.1} parent=0
    #allocation3 [shape = 'u8[8192]{0}', space=vmem, size = 0x2000, scoped, tag = 'input window, operand 0, single buffered']
    #allocation4 [shape = 's32[1]{0}', space=sflag, size = 0x4, scoped, tag = 'scoped memory for tpu_custom_call.1']
    %6 = vsyncpa [#allocation4], 0
    // Predicated region
    $region2: #{tpu_custom_call.1} parent=1 // pred_check
      _
    $region3: #{tpu_custom_call.1} parent=1 // pred_check_branch
      %8 = sbr.rel (0) target = $region5
    $region4: #{tpu_custom_call.1} parent=1 // pred_region
      %s10 = ssub.s32 256, 256
      %11 = vsyncadd [#allocation4], %s10
      %s13 = sshll.u32 [#allocation3], 4
      %s14 = int_to_ptr.vmem [resolvable:$true] %s13
      %16 = dma.hbm_to_vmem [thread:$0]  %s0, 256, %s14, [#allocation4]
    $region5: #{tpu_custom_call.1} parent=1 // pred_fallthru
      _
    // Predicated region
    $region6: #{tpu_custom_call.1} parent=1 // pred_check
      _
    $region7: #{tpu_custom_call.1} parent=1 // pred_check_branch
      %18 = sbr.rel (0) target = $region9
    $region8: #{tpu_custom_call.1} parent=1 // pred_region
      %19 = dma.done [#allocation4], 256
    $region9: #{tpu_custom_call.1} parent=1 // pred_fallthru
      _
    %p20 = scmp.eq.s32.totalorder 0, 0
    // Predicated region
    $region10: #{tpu_custom_call.1} parent=1 // pred_check
      %p21 = pneg %p20
    $region11: #{tpu_custom_call.1} parent=1 // pred_check_branch
      %23 = sbr.rel (%p21) target = $region13
    $region12: #{tpu_custom_call.1} parent=1 // pred_region
      %24 = vst [vmem:[#allocation2] sm:$0xff] 0.0
    $region13: #{tpu_custom_call.1} parent=1 // pred_fallthru
      _
    %v25 = vld [vmem:[#allocation3] sm:$0xff]
    %v26 = vmax.f32 %v25, 1e-06
    %v27 = vmul.f32 %v26, %v26
    %v28 = vmul.f32 %v27, %v26
    %v29 = vld [vmem:[#allocation3 + $0x8] sm:$0xff]
    %v30 = vmax.f32 %v29, 1e-06
    %v31 = vmul.f32 %v30, %v30
    %v32 = vmul.f32 %v31, %v30
    %v33 = vadd.f32 %v28, %v32
    %v34 = vld [vmem:[#allocation2] sm:$0xff]
    %v35 = vmul.f32 %v33, 0.00390625
    %v36 = vadd.f32 %v34, %v35
    %37 = vst [vmem:[#allocation2] sm:$0xff] %v36
    // Predicated region
    $region14: #{tpu_custom_call.1} parent=1 // pred_check
      %p38 = pneg %p20
    $region15: #{tpu_custom_call.1} parent=1 // pred_check_branch
      %40 = sbr.rel (%p38) target = $region17
    $region16: #{tpu_custom_call.1} parent=1 // pred_region
      %v41 = vld [vmem:[#allocation2] sm:$0xff]
      %42 = vadd.xlane.f32.xlu0 %v41
      %v43 = vpop.xlane.xlu0 %42
      %v44 = vpow.f32 %v43, 0.33333334
      %vm45 = vcmask 7168
      %46 = vst.msk [vmem:[%s1] sm:$0xff] %vm45, %v44
    $region17: #{tpu_custom_call.1} parent=1 // pred_fallthru
      _
    // Predicated region
    $region18: #{tpu_custom_call.1} parent=1 // pred_check
      _
    $region19: #{tpu_custom_call.1} parent=1 // pred_check_branch
      %48 = sbr.rel (0) target = $region21
    $region20: #{tpu_custom_call.1} parent=1 // pred_region
      _
    $region21: #{tpu_custom_call.1} parent=1 // pred_fallthru
      _
    // Predicated region
    $region22: #{tpu_custom_call.1} parent=1 // pred_check
      _
    $region23: #{tpu_custom_call.1} parent=1 // pred_check_branch
      %50 = sbr.rel (0) target = $region25
    $region24: #{tpu_custom_call.1} parent=1 // pred_region
      _
    $region25: #{tpu_custom_call.1} parent=1 // pred_fallthru
      _
    %51 = vsyncpa [#allocation4], 1

</llo_original>
